<compile_context>
chip_gen: v6e
topology: v6e:2x2x1
jax: 0.10.0
libtpu: 0.0.40
codegen_flags: <defaults>
</compile_context>

<pallas_src>
import functools

import jax
import jax.numpy as jnp
from jax import lax
from jax.experimental import pallas as pl
from jax.experimental.pallas import tpu as pltpu

_LANES = 128
_TARGET_BLOCK_BYTES = 1 << 20  # ~1 MiB per block (double-buffered in+out ~4 MiB VMEM)


def _round_up(n: int, m: int) -> int:
    return ((n + m - 1) // m) * m


def _add_uniform_noise_kernel(seed_ref, x_ref, o_ref, *, sigma: float):
    """o = x + U(-sigma, sigma); noise from a counter-based hash of the global
    element index, so the realized draw does not depend on the tiling."""
    i = pl.program_id(0)
    br, lanes = x_ref.shape

    # Global element index of every element in this block.
    row = lax.broadcasted_iota(jnp.int32, (br, lanes), 0) + i * br
    col = lax.broadcasted_iota(jnp.int32, (br, lanes), 1)
    idx = (row * lanes + col).astype(jnp.uint32)

    # Counter-based RNG: lowbias32 finalizer of (index + seed * golden-ratio).
    h = idx + seed_ref[0].astype(jnp.uint32) * jnp.uint32(0x9E3779B9)
    h = h ^ (h >> 16)
    h = h * jnp.uint32(0x7FEB352D)
    h = h ^ (h >> 15)
    h = h * jnp.uint32(0x846CA68B)
    h = h ^ (h >> 16)

    # Top 24 bits -> [0, 2^24), single fused affine -> [-sigma, sigma).
    u24 = (h >> 8).astype(jnp.int32).astype(jnp.float32)
    noise = u24 * jnp.float32(2.0 * sigma / (1 << 24)) - jnp.float32(sigma)

    # Add in f32, cast once to the output dtype.
    o_ref[...] = (x_ref[...].astype(jnp.float32) + noise).astype(o_ref.dtype)


def _noise_add_2d(x2d: jax.Array, seed_arr: jax.Array, sigma: float) -> jax.Array:
    rows, lanes = x2d.shape
    assert lanes == _LANES
    itemsize = jnp.dtype(x2d.dtype).itemsize
    sub = 8 * max(1, 4 // itemsize)            # sublane packing: 8 f32 / 16 bf16 / 32 int8
    target_rows = max(sub, _TARGET_BLOCK_BYTES // (lanes * itemsize))

    if rows <= target_rows:
        block_rows = rows                      # single full-extent block (always legal)
    else:
        block_rows = target_rows               # big block, ragged last block via cdiv grid
    grid = (pl.cdiv(rows, block_rows),)

    kernel = functools.partial(_add_uniform_noise_kernel, sigma=sigma)
    return pl.pallas_call(
        kernel,
        out_shape=jax.ShapeDtypeStruct((rows, lanes), x2d.dtype),
        grid_spec=pltpu.PrefetchScalarGridSpec(
            num_scalar_prefetch=1,
            grid=grid,
            in_specs=[pl.BlockSpec((block_rows, lanes), lambda i, seed: (i, 0))],
            out_specs=pl.BlockSpec((block_rows, lanes), lambda i, seed: (i, 0)),
        ),
        compiler_params=pltpu.CompilerParams(
            # Grid steps are fully independent -> shard across TCs on v7x.
            dimension_semantics=("parallel",),
        ),
    )(seed_arr, x2d)


def weight_additive_uniform_noise(
    x,
    sigma: float,
    seed=0,
    *,
    enabled: bool = True,
    training: bool = True,
):
    """JAX/Pallas equivalent of WeightAdditiveUniformNoiseLayer.forward."""
    assert sigma >= 0, f"sigma must be non-negative, but got {sigma}"
    if x is None or not (enabled and training):
        return x  # identity path, exactly as in the PyTorch module

    orig_shape = x.shape
    n = x.size
    if n == 0:
        return x

    seed_arr = jnp.atleast_1d(jnp.asarray(seed, dtype=jnp.int32))

    if n % _LANES == 0:
        # Common case (weights): pure metadata reshape, no host-side pad/slice pass.
        x2d = x.reshape(n // _LANES, _LANES)
        out2d = _noise_add_2d(x2d, seed_arr, float(sigma))
        return out2d.reshape(orig_shape)

    # Rare ragged case: pad the flat tail up to a lane multiple.
    # TODO(synk): handle the tail with a masked edge block instead of a host-side pad.
    pad = _round_up(n, _LANES) - n
    flat = jnp.pad(x.reshape(-1), (0, pad))
    out2d = _noise_add_2d(flat.reshape(-1, _LANES), seed_arr, float(sigma))
    return out2d.reshape(-1)[:n].reshape(orig_shape)


if __name__ == "__main__":
    key = jax.random.PRNGKey(0)
    # Weight-like / activation-like tensor (NCHW-style shape).
    x = jax.random.normal(key, (2, 4, 16, 16), dtype=jnp.float32)
    sigma = 0.1

    # Enabled + training: noise is added.
    y = weight_additive_uniform_noise(x, sigma, seed=1234, enabled=True, training=True)
    y = jax.block_until_ready(y)
    assert y.shape == x.shape and y.dtype == x.dtype
    diff = jnp.abs(y - x)
    assert bool(jnp.all(diff <= sigma + 1e-5)), "noise magnitude exceeds sigma"
    assert bool(jnp.max(diff) > 0.0), "noise was not applied"
    assert bool(jnp.abs(jnp.mean(y - x)) < 0.5 * sigma), "noise badly biased"

    # Ragged-size input exercises the padded-tail path.
    x2 = jax.random.normal(jax.random.PRNGKey(1), (3, 5, 7), dtype=jnp.float32)
    y2 = jax.block_until_ready(weight_additive_uniform_noise(x2, sigma, seed=7))
    assert y2.shape == x2.shape and y2.dtype == x2.dtype
    assert bool(jnp.all(jnp.abs(y2 - x2) <= sigma + 1e-5))

    # Disabled (or eval) path: exact identity.
    y_id = jax.block_until_ready(
        weight_additive_uniform_noise(x, sigma, enabled=False, training=True))
    assert bool(jnp.all(y_id == x))
    y_ev = jax.block_until_ready(
        weight_additive_uniform_noise(x, sigma, enabled=True, training=False))
    assert bool(jnp.all(y_ev == x))

    print("KERNEL_OK")
</pallas_src>

<mosaic_0001>
module attributes {stable_mosaic.version = 11 : i64} {
  func.func @_add_uniform_noise_kernel(%arg0: i32, %arg1: memref<1xi32, #tpu.memory_space<smem>>, %arg2: memref<16x128xf32, #tpu.memory_space<vmem>>, %arg3: memref<16x128xf32, #tpu.memory_space<vmem>>) attributes {dimension_semantics = [#tpu.dimension_semantics<parallel>], iteration_bounds = array<i64: 1>, scalar_prefetch = 1 : i64, scratch_operands = 0 : i64, tpu.core_type = #tpu.core_type<tc>, window_params = [{transform_indices = @transform_0, window_bounds = array<i64: 16, 128>}, {transform_indices = @transform_1, window_bounds = array<i64: 16, 128>}]} {
    %0 = tpu.iota {dimensions = array<i32: 0>} : vector<16x128xi32>
    %c16_i32 = arith.constant 16 : i32
    %1 = arith.muli %arg0, %c16_i32 : i32
    %2 = vector.broadcast %1 : i32 to vector<16x128xi32>
    %3 = arith.addi %0, %2 : vector<16x128xi32>
    %4 = tpu.iota {dimensions = array<i32: 1>} : vector<16x128xi32>
    %c128_i32 = arith.constant 128 : i32
    %5 = vector.broadcast %c128_i32 : i32 to vector<16x128xi32>
    %6 = arith.muli %3, %5 : vector<16x128xi32>
    %7 = arith.addi %6, %4 : vector<16x128xi32>
    %c0 = arith.constant 0 : index
    %8 = memref.load %arg1[%c0] : memref<1xi32, #tpu.memory_space<smem>>
    %c-1640531527_i32 = arith.constant -1640531527 : i32
    %9 = arith.muli %8, %c-1640531527_i32 : i32
    %10 = vector.broadcast %9 : i32 to vector<16x128xi32>
    %11 = arith.addi %7, %10 : vector<16x128xi32>
    %c16_i32_0 = arith.constant 16 : i32
    %12 = vector.broadcast %c16_i32_0 : i32 to vector<16x128xi32>
    %13 = arith.shrui %11, %12 : vector<16x128xi32>
    %14 = arith.xori %11, %13 : vector<16x128xi32>
    %c2146121005_i32 = arith.constant 2146121005 : i32
    %15 = vector.broadcast %c2146121005_i32 : i32 to vector<16x128xi32>
    %16 = arith.muli %14, %15 : vector<16x128xi32>
    %c15_i32 = arith.constant 15 : i32
    %17 = vector.broadcast %c15_i32 : i32 to vector<16x128xi32>
    %18 = arith.shrui %16, %17 : vector<16x128xi32>
    %19 = arith.xori %16, %18 : vector<16x128xi32>
    %c-2073254261_i32 = arith.constant -2073254261 : i32
    %20 = vector.broadcast %c-2073254261_i32 : i32 to vector<16x128xi32>
    %21 = arith.muli %19, %20 : vector<16x128xi32>
    %c16_i32_1 = arith.constant 16 : i32
    %22 = vector.broadcast %c16_i32_1 : i32 to vector<16x128xi32>
    %23 = arith.shrui %21, %22 : vector<16x128xi32>
    %24 = arith.xori %21, %23 : vector<16x128xi32>
    %c8_i32 = arith.constant 8 : i32
    %25 = vector.broadcast %c8_i32 : i32 to vector<16x128xi32>
    %26 = arith.shrui %24, %25 : vector<16x128xi32>
    %27 = arith.sitofp %26 : vector<16x128xi32> to vector<16x128xf32>
    %cst = arith.constant 1.19209291E-8 : f32
    %28 = vector.broadcast %cst : f32 to vector<16x128xf32>
    %29 = arith.mulf %27, %28 : vector<16x128xf32>
    %cst_2 = arith.constant 1.000000e-01 : f32
    %30 = vector.broadcast %cst_2 : f32 to vector<16x128xf32>
    %31 = arith.subf %29, %30 : vector<16x128xf32>
    %c0_3 = arith.constant 0 : index
    %c0_4 = arith.constant 0 : index
    %32 = vector.load %arg2[%c0_3, %c0_4] : memref<16x128xf32, #tpu.memory_space<vmem>>, vector<16x128xf32>
    %33 = arith.addf %32, %31 : vector<16x128xf32>
    %c0_5 = arith.constant 0 : index
    %c0_6 = arith.constant 0 : index
    %34 = vector.load %arg3[%c0_5, %c0_6] : memref<16x128xf32, #tpu.memory_space<vmem>>, vector<16x128xf32>
    tpu.vector_store %arg3[%c0_5, %c0_6], %33 {strides = array<i32>} : memref<16x128xf32, #tpu.memory_space<vmem>>, vector<16x128xf32>,
    return
  }
  func.func @transform_0(%arg0: i32, %arg1: memref<1xi32, #tpu.memory_space<smem>>) -> (i32, i32) {
    %c0_i32 = arith.constant 0 : i32
    %c0_i32_0 = arith.constant 0 : i32
    return %arg0, %c0_i32 : i32, i32
  }
  func.func @transform_1(%arg0: i32, %arg1: memref<1xi32, #tpu.memory_space<smem>>) -> (i32, i32) {
    %c0_i32 = arith.constant 0 : i32
    %c0_i32_0 = arith.constant 0 : i32
    return %arg0, %c0_i32 : i32, i32
  }
}

</mosaic_0001>

<llo_original>
// kernel: tpu_custom_call.1
$region0: #{tpu_custom_call.1}
  #allocation0 [shape = 'u32[]', space=smem, size = 0x4, offset = 0x4, fixed_abs, tag = 'smem constant byte address 0x4 - core index']
  #allocation1 [shape = 'u32[144,128]{1,0:T(1,128)}', space=vmem, size = 0x12000, scoped, tag = 'internal scratch']
  #allocation2 [shape = 's32[1]{0}', space=sflag, size = 0x4, scoped, tag = 'scoped memory for tpu_custom_call.1']
  #allocation3 [shape = 's32[1]{0:T(128)S(6)}', space=smem, size = 0x200, scoped, tag = 'prefetched SMEM operand 0']
  %s0 = inlined_call_operand.<no memory space> [shape: s32[1], index: 0, kind: input, shape index: {}]
  %s1 = inlined_call_operand.hbm [shape: f32[16,128], index: 1, kind: input, shape index: {}]
  %s2 = inlined_call_operand.hbm [shape: f32[16,128], index: 2, kind: output, shape index: {}]
  %s3 = sld [smem:[#allocation0]]
  $region18: #{tpu_custom_call.1} parent=0
    _
  %s5 = ssub.s32 1, %s3
  %s6 = scalar_select 0, %s5, %s3
  %7 = sst [smem:[#allocation3]] %s0
  $region1: #{tpu_custom_call.1} parent=0
    #allocation4 [shape = 'u8[8192]{0}', space=vmem, size = 0x2000, scoped, tag = 'input window, operand 1, single buffered']
    #allocation5 [shape = 's32[1]{0}', space=sflag, size = 0x4, scoped, tag = 'scoped memory for tpu_custom_call.1']
    #allocation6 [shape = 's32[1]{0}', space=sflag, size = 0x4, scoped, tag = 'scoped memory for tpu_custom_call.1']
    #allocation7 [shape = 'u8[8192]{0}', space=vmem, size = 0x2000, scoped, tag = 'output window, operand 0, single buffered']
    %8 = vsyncpa [#allocation5], 0
    %9 = vsyncpa [#allocation6], 0
    // Predicated region
    $region2: #{tpu_custom_call.1} parent=1 // pred_check
      _
    $region3: #{tpu_custom_call.1} parent=1 // pred_check_branch
      %11 = sbr.rel (0) target = $region5
    $region4: #{tpu_custom_call.1} parent=1 // pred_region
      %s13 = ssub.s32 256, 256
      %14 = vsyncadd [#allocation5], %s13
      %s15 = sshll.u32 [#allocation4], 4
      %s16 = int_to_ptr.vmem [resolvable:$true] %s15
      %21 = dma.hbm_to_vmem [thread:$0]  %s1, 256, %s16, [#allocation5], 128, 128, 8
    $region5: #{tpu_custom_call.1} parent=1 // pred_fallthru
      _
    // Predicated region
    $region6: #{tpu_custom_call.1} parent=1 // pred_check
      _
    $region7: #{tpu_custom_call.1} parent=1 // pred_check_branch
      %23 = sbr.rel (0) target = $region9
    $region8: #{tpu_custom_call.1} parent=1 // pred_region
      %24 = dma.done [#allocation5], 256
    $region9: #{tpu_custom_call.1} parent=1 // pred_fallthru
      _
    %v25 = vlaneseq
    %v26 = vshrl.u32 %v25, 7
    %v27 = vadd.s32 %v26, 8
    %s28 = smul.u32 0, 16
    %v29 = vstv %s28
    %v30 = vadd.s32 %v26, %v29
    %v31 = vadd.s32 %v27, %v29
    %v32 = vlaneseq
    %v33 = vand.u32 %v32, 127
    %v34 = vmul.u32 %v30, 128
    %v35 = vmul.u32 %v31, 128
    %v36 = vadd.s32 %v34, %v33
    %v37 = vadd.s32 %v35, %v33
    %s38 = sld [smem:[#allocation3]]
    %s39 = smul.u32 %s38, 2654435769
    %v40 = vstv %s39
    %v41 = vadd.s32 %v36, %v40
    %v42 = vadd.s32 %v37, %v40
    %v43 = vshrl.u32 %v41, 16
    %v44 = vshrl.u32 %v42, 16
    %v45 = vxor.u32 %v41, %v43
    %v46 = vxor.u32 %v42, %v44
    %v47 = vmul.u32 %v45, 2146121005
    %v48 = vmul.u32 %v46, 2146121005
    %v49 = vshrl.u32 %v47, 15
    %v50 = vshrl.u32 %v48, 15
    %v51 = vxor.u32 %v47, %v49
    %v52 = vxor.u32 %v48, %v50
    %v53 = vmul.u32 %v51, 2221713035
    %v54 = vmul.u32 %v52, 2221713035
    %v55 = vshrl.u32 %v53, 16
    %v56 = vshrl.u32 %v54, 16
    %v57 = vxor.u32 %v53, %v55
    %v58 = vxor.u32 %v54, %v56
    %v59 = vshrl.u32 %v57, 8
    %v60 = vshrl.u32 %v58, 8
    %v61 = vcvt.s32.f32 %v59
    %v62 = vcvt.s32.f32 %v60
    %v63 = vmul.f32 %v61, 1.1920929e-08
    %v64 = vmul.f32 %v62, 1.1920929e-08
    %v65 = vsub.f32 %v63, 0.1
    %v66 = vsub.f32 %v64, 0.1
    %v67 = vld [vmem:[#allocation4] sm:$0xff]
    %v68 = vld [vmem:[#allocation4 + $0x8] sm:$0xff]
    %v69 = vadd.f32 %v67, %v65
    %v70 = vadd.f32 %v68, %v66
    %71 = vst [vmem:[#allocation7] sm:$0xff] %v69
    %72 = vst [vmem:[#allocation7 + $0x8] sm:$0xff] %v70
    // Predicated region
    $region10: #{tpu_custom_call.1} parent=1 // pred_check
      _
    $region11: #{tpu_custom_call.1} parent=1 // pred_check_branch
      %74 = sbr.rel (0) target = $region13
    $region12: #{tpu_custom_call.1} parent=1 // pred_region
      %s76 = ssub.s32 256, 256
      %77 = vsyncadd [#allocation6], %s76
      %s78 = sshll.u32 [#allocation7], 4
      %s79 = int_to_ptr.vmem [resolvable:$true] %s78
      %84 = dma.vmem_to_hbm [thread:$0]  %s79, 256, %s2, [#allocation6], 128, 128, 8
    $region13: #{tpu_custom_call.1} parent=1 // pred_fallthru
      _
    // Predicated region
    $region14: #{tpu_custom_call.1} parent=1 // pred_check
      _
    $region15: #{tpu_custom_call.1} parent=1 // pred_check_branch
      %86 = sbr.rel (0) target = $region17
    $region16: #{tpu_custom_call.1} parent=1 // pred_region
      %87 = dma.done [#allocation6], 256
    $region17: #{tpu_custom_call.1} parent=1 // pred_fallthru
      _
    %88 = vsyncpa [#allocation5], 1
    %89 = vsyncpa [#allocation6], 1

</llo_original>
